<compile_context>
chip_gen: v7x
topology: tpu7x:2x2x1
jax: 0.10.0
libtpu: 0.0.40
codegen_flags: <defaults>
</compile_context>

<pallas_src>
import math

import jax
import jax.numpy as jnp
from jax.experimental import pallas as pl
from jax.experimental.pallas import tpu as pltpu

LN_EPS = 1e-5                        # nn.LayerNorm default
_INV_SQRT2 = 1.0 / math.sqrt(2.0)    # exact (erf) GELU, PyTorch default
_TANH_C0 = math.sqrt(2.0 / math.pi)  # tanh-approx GELU constants
_TANH_C1 = 0.044715


def _round_up(x, m):
    return ((x + m - 1) // m) * m


def _resident_spec(block_shape, index_map):
    """BlockSpec for a grid-constant operand; single-buffered when supported."""
    try:
        return pl.BlockSpec(block_shape, index_map,
                            pipeline_mode=pl.Buffered(1))
    except Exception:  # pipeline_mode / Buffered(1) unavailable -> default
        return pl.BlockSpec(block_shape, index_map)


def _vmem_budget_bytes():
    """~3/4 of this generation's per-core VMEM (headroom for internal scratch)."""
    try:
        cap = int(pltpu.get_tpu_info().vmem_capacity_bytes)
    except Exception:
        cap = 64 << 20           # conservative (v7x-sized) fallback
    return (cap // 4) * 3


def _make_kernel(grid_k, use_tanh_gelu):
    """Build the fused GELU -> Linear -> LayerNorm kernel body."""

    def kernel(x_ref, w_ref, p_ref, o_ref, acc_ref=None):
        # ---- GELU in f32 (exact erf by default, matching nn.GELU()) ----
        x = x_ref[...].astype(jnp.float32)
        if use_tanh_gelu:
            h = 0.5 * x * (1.0 + jnp.tanh(
                jnp.float32(_TANH_C0) * (x + jnp.float32(_TANH_C1) * x * x * x)))
        else:
            h = 0.5 * x * (1.0 + jax.lax.erf(x * jnp.float32(_INV_SQRT2)))

        # ---- Linear partial product: MXU in the weight's native dtype,
        #      accumulate in f32 (no f32 upcast of the operands).
        part = jnp.dot(h.astype(w_ref.dtype), w_ref[...],
                       preferred_element_type=jnp.float32)

        def epilogue(y):
            p = p_ref[...].astype(jnp.float32)       # (3, D_out): b, gamma, beta
            y = y + p[0:1]
            mean = jnp.mean(y, axis=-1, keepdims=True)
            diff = y - mean
            var = jnp.mean(diff * diff, axis=-1, keepdims=True)
            out = diff * jax.lax.rsqrt(var + jnp.float32(LN_EPS)) * p[1:2] + p[2:3]
            o_ref[...] = out.astype(o_ref.dtype)

        if grid_k == 1:
            # Resident weight: no accumulator round-trip needed.
            epilogue(part)
        else:
            k = pl.program_id(1)

            @pl.when(k == 0)
            def _():
                acc_ref[...] = jnp.zeros_like(acc_ref)

            acc_ref[...] += part

            @pl.when(k == pl.num_programs(1) - 1)
            def _():
                epilogue(acc_ref[...])

    return kernel


def img_linear(x, w_t, b, gamma, beta, *, tm=None, tk=None,
               vmem_limit_bytes=None, matmul_dtype=None, use_tanh_gelu=False):
    """Fused GELU -> Linear -> LayerNorm.

    x:      (N, D_in)
    w_t:    (D_in, D_out)  -- nn.Linear weight, pre-transposed
    b, gamma, beta: (D_out,)
    Returns (N, D_out) in x.dtype.
    """
    N, D_in = x.shape
    D_out = w_t.shape[1]
    assert w_t.shape[0] == D_in

    if matmul_dtype is not None:
        w_t = w_t.astype(matmul_dtype)   # kernel casts the GELU output to match

    if vmem_limit_bytes is None:
        vmem_limit_bytes = _vmem_budget_bytes()
    budget = int(vmem_limit_bytes)

    x_isz = x.dtype.itemsize
    w_isz = w_t.dtype.itemsize
    o_isz = x_isz

    # ---- K tile: keep the weight VMEM-resident (single-buffered) when it
    # fits ~half the budget; otherwise K-tile with the largest 128-multiple
    # divisor of D_in whose double-buffered block fits.
    if tk is None:
        if D_in * D_out * w_isz <= budget // 2:
            tk = D_in
        else:
            tk = D_in
            for cand in range((D_in // 128) * 128, 127, -128):
                if D_in % cand == 0 and 2 * cand * D_out * w_isz <= budget // 2:
                    tk = cand
                    break
    assert D_in % tk == 0, ("K tile must divide D_in; padding the reduction "
                            "axis would corrupt the accumulation")
    grid_k = D_in // tk

    # ---- M tile ----
    if tm is None:
        tm = 512 if budget >= (72 << 20) else 256
        # Keep >= ~4 row tiles so the 'parallel' m axis feeds both v7x cores.
        tm = min(tm, _round_up(max(pl.cdiv(N, 4), 1), 8))
    tm = max(8, min(_round_up(tm, 8), _round_up(N, 8)))

    def _step_bytes(tm_):
        w_bufs = 1 if grid_k == 1 else 2
        return (2 * tm_ * tk * x_isz                         # x tiles (2-buf)
                + w_bufs * tk * D_out * w_isz                # weight tile(s)
                + 2 * tm_ * D_out * o_isz                    # output tiles
                + (0 if grid_k == 1 else tm_ * D_out * 4)    # f32 accumulator
                + 3 * D_out * 4)                             # packed LN params

    while tm > 8 and _step_bytes(tm) > budget:
        tm = max(8, _round_up(tm // 2, 8))
    grid_m = pl.cdiv(N, tm)

    # bias / gamma / beta packed into one resident (3, D_out) f32 array.
    params = jnp.stack([b.astype(jnp.float32),
                        gamma.astype(jnp.float32),
                        beta.astype(jnp.float32)], axis=0)

    if grid_k == 1:
        w_spec = _resident_spec((tk, D_out), lambda i, k: (0, 0))
        scratch = []
    else:
        w_spec = pl.BlockSpec((tk, D_out), lambda i, k: (k, 0))
        scratch = [pltpu.VMEM((tm, D_out), jnp.float32)]

    cost = pl.CostEstimate(
        flops=2 * N * D_in * D_out,
        transcendentals=N * D_in,
        bytes_accessed=(N * D_in * x_isz + D_in * D_out * w_isz
                        + 3 * D_out * 4 + N * D_out * o_isz))

    kernel = _make_kernel(grid_k, use_tanh_gelu)

    return pl.pallas_call(
        kernel,
        out_shape=jax.ShapeDtypeStruct((N, D_out), x.dtype),
        grid_spec=pltpu.PrefetchScalarGridSpec(
            num_scalar_prefetch=0,
            grid=(grid_m, grid_k),                    # reduction axis last
            in_specs=[
                pl.BlockSpec((tm, tk), lambda i, k: (i, k)),       # x row tile
                w_spec,                                            # weight
                _resident_spec((3, D_out), lambda i, k: (0, 0)),   # b/gamma/beta
            ],
            out_specs=pl.BlockSpec((tm, D_out), lambda i, k: (i, 0)),
            scratch_shapes=scratch,
        ),
        compiler_params=pltpu.CompilerParams(
            dimension_semantics=("parallel", "arbitrary"),
            vmem_limit_bytes=budget,
        ),
        cost_estimate=cost,
    )(x, w_t, params)


if __name__ == "__main__":
    # Small shapes consistent with the module (2048 -> 512 scaled down).
    # N deliberately NOT a multiple of the row tile so the ragged tail
    # (partial last block, masked store) is exercised without any padding.
    N, D_in, D_out = 20, 256, 128

    key = jax.random.PRNGKey(0)
    kx, kw, kb = jax.random.split(key, 3)

    x = jax.random.normal(kx, (N, D_in), dtype=jnp.float32)

    # nn.Linear init: weight (D_out, D_in) ~ U(-1/sqrt(D_in), 1/sqrt(D_in))
    bound = 1.0 / math.sqrt(D_in)
    w = jax.random.uniform(kw, (D_out, D_in), minval=-bound, maxval=bound,
                           dtype=jnp.float32)
    b = jax.random.uniform(kb, (D_out,), minval=-bound, maxval=bound,
                           dtype=jnp.float32)
    gamma = jnp.ones((D_out,), dtype=jnp.float32)   # nn.LayerNorm init
    beta = jnp.zeros((D_out,), dtype=jnp.float32)

    def reference(xv, gelu="erf"):
        if gelu == "erf":
            h = 0.5 * xv * (1.0 + jax.lax.erf(xv / jnp.sqrt(2.0)))
        else:
            h = 0.5 * xv * (1.0 + jnp.tanh(_TANH_C0 * (xv + _TANH_C1 * xv ** 3)))
        y = h @ w.T + b
        mu = jnp.mean(y, axis=-1, keepdims=True)
        var = jnp.mean((y - mu) ** 2, axis=-1, keepdims=True)
        return (y - mu) / jnp.sqrt(var + LN_EPS) * gamma + beta

    ref = reference(x)

    # 1) f32, resident-weight path (grid_k == 1), ragged tail.
    out = jax.block_until_ready(img_linear(x, w.T, b, gamma, beta))
    assert out.shape == (N, D_out)
    assert jnp.allclose(out, ref, atol=1e-4, rtol=1e-4), "f32 resident mismatch"

    # 2) f32, forced K-tiled accumulator path (grid_k == 2).
    out_k = jax.block_until_ready(img_linear(x, w.T, b, gamma, beta, tk=128))
    assert jnp.allclose(out_k, ref, atol=1e-4, rtol=1e-4), "K-tiled mismatch"

    # 3) bf16 operands (native MXU path, f32 accumulation).
    out_bf16 = jax.block_until_ready(
        img_linear(x.astype(jnp.bfloat16), w.T.astype(jnp.bfloat16),
                   b, gamma, beta))
    assert jnp.allclose(out_bf16.astype(jnp.float32), ref,
                        atol=5e-2, rtol=5e-2), "bf16 mismatch"

    # 4) f32 inputs with the MXU forced onto bf16 operands (v6e/v7x fast path).
    out_mx = jax.block_until_ready(
        img_linear(x, w.T, b, gamma, beta, matmul_dtype=jnp.bfloat16))
    assert jnp.allclose(out_mx, ref, atol=5e-2, rtol=5e-2), "bf16-MXU mismatch"

    # 5) tanh-approx GELU (EUP path), checked against its own reference.
    out_tanh = jax.block_until_ready(
        img_linear(x, w.T, b, gamma, beta, use_tanh_gelu=True))
    assert jnp.allclose(out_tanh, reference(x, gelu="tanh"),
                        atol=2e-3, rtol=2e-3), "tanh-GELU mismatch"

    print("KERNEL_OK")
</pallas_src>

<mosaic_0001>
module attributes {stable_mosaic.version = 11 : i64} {
  func.func @kernel(%arg0: i32, %arg1: i32, %arg2: memref<8x256xf32, #tpu.memory_space<vmem>>, %arg3: memref<256x128xf32, #tpu.memory_space<vmem>>, %arg4: memref<3x128xf32, #tpu.memory_space<vmem>>, %arg5: memref<8x128xf32, #tpu.memory_space<vmem>>) attributes {dimension_semantics = [#tpu.dimension_semantics<parallel>, #tpu.dimension_semantics<arbitrary>], iteration_bounds = array<i64: 3, 1>, scalar_prefetch = 0 : i64, scratch_operands = 0 : i64, tpu.core_type = #tpu.core_type<tc>, window_params = [{transform_indices = @transform_0, window_bounds = array<i64: 8, 256>}, {pipeline_mode = #tpu.pipeline_mode<synchronous>, transform_indices = @transform_1, window_bounds = array<i64: 256, 128>}, {pipeline_mode = #tpu.pipeline_mode<synchronous>, transform_indices = @transform_2, window_bounds = array<i64: 3, 128>}, {transform_indices = @transform_3, window_bounds = array<i64: 8, 128>}]} {
    %c0 = arith.constant 0 : index
    %c0_0 = arith.constant 0 : index
    %0 = vector.load %arg2[%c0, %c0_0] : memref<8x256xf32, #tpu.memory_space<vmem>>, vector<8x256xf32>
    %cst = arith.constant 5.000000e-01 : f32
    %1 = vector.broadcast %cst : f32 to vector<8x256xf32>
    %2 = arith.mulf %1, %0 : vector<8x256xf32>
    %cst_1 = arith.constant 0.707106769 : f32
    %3 = vector.broadcast %cst_1 : f32 to vector<8x256xf32>
    %4 = arith.mulf %0, %3 : vector<8x256xf32>
    %5 = math.erf %4 : vector<8x256xf32>
    %cst_2 = arith.constant 1.000000e+00 : f32
    %6 = vector.broadcast %cst_2 : f32 to vector<8x256xf32>
    %7 = arith.addf %6, %5 : vector<8x256xf32>
    %8 = arith.mulf %2, %7 : vector<8x256xf32>
    %c0_3 = arith.constant 0 : index
    %c0_4 = arith.constant 0 : index
    %9 = vector.load %arg3[%c0_3, %c0_4] : memref<256x128xf32, #tpu.memory_space<vmem>>, vector<256x128xf32>
    %cst_5 = arith.constant dense<0.000000e+00> : vector<8x128xf32>
    %10 = tpu.matmul %8, %9, %cst_5 {dimension_numbers = #tpu.dot_dimension_numbers<[1], [0], [0], [1], [0, 0, 1, 1], [], []>} : vector<8x256xf32>, vector<256x128xf32>, vector<8x128xf32> -> vector<8x128xf32>
    %c0_6 = arith.constant 0 : index
    %c0_7 = arith.constant 0 : index
    %11 = vector.load %arg4[%c0_6, %c0_7] : memref<3x128xf32, #tpu.memory_space<vmem>>, vector<3x128xf32>
    %12 = vector.extract_strided_slice %11 {offsets = [0, 0], sizes = [1, 128], strides = [1, 1]} : vector<3x128xf32> to vector<1x128xf32>
    %13 = vector.broadcast %12 : vector<1x128xf32> to vector<8x128xf32>
    %14 = arith.addf %10, %13 : vector<8x128xf32>
    %cst_8 = arith.constant dense<0.000000e+00> : vector<8xf32>
    %15 = vector.multi_reduction <add>, %14, %cst_8 [1] : vector<8x128xf32> to vector<8xf32>
    %16 = vector.shape_cast %15 : vector<8xf32> to vector<8x1xf32>
    %cst_9 = arith.constant 1.280000e+02 : f32
    %17 = vector.broadcast %cst_9 : f32 to vector<8x1xf32>
    %18 = arith.divf %16, %17 : vector<8x1xf32>
    %19 = vector.broadcast %18 : vector<8x1xf32> to vector<8x128xf32>
    %20 = arith.subf %14, %19 : vector<8x128xf32>
    %21 = arith.mulf %20, %20 : vector<8x128xf32>
    %cst_10 = arith.constant dense<0.000000e+00> : vector<8xf32>
    %22 = vector.multi_reduction <add>, %21, %cst_10 [1] : vector<8x128xf32> to vector<8xf32>
    %23 = vector.shape_cast %22 : vector<8xf32> to vector<8x1xf32>
    %cst_11 = arith.constant 1.280000e+02 : f32
    %24 = vector.broadcast %cst_11 : f32 to vector<8x1xf32>
    %25 = arith.divf %23, %24 : vector<8x1xf32>
    %cst_12 = arith.constant 9.99999974E-6 : f32
    %26 = vector.broadcast %cst_12 : f32 to vector<8x1xf32>
    %27 = arith.addf %25, %26 : vector<8x1xf32>
    %28 = math.rsqrt %27 : vector<8x1xf32>
    %29 = vector.broadcast %28 : vector<8x1xf32> to vector<8x128xf32>
    %30 = arith.mulf %20, %29 : vector<8x128xf32>
    %31 = vector.extract_strided_slice %11 {offsets = [1, 0], sizes = [1, 128], strides = [1, 1]} : vector<3x128xf32> to vector<1x128xf32>
    %32 = vector.broadcast %31 : vector<1x128xf32> to vector<8x128xf32>
    %33 = arith.mulf %30, %32 : vector<8x128xf32>
    %34 = vector.extract_strided_slice %11 {offsets = [2, 0], sizes = [1, 128], strides = [1, 1]} : vector<3x128xf32> to vector<1x128xf32>
    %35 = vector.broadcast %34 : vector<1x128xf32> to vector<8x128xf32>
    %36 = arith.addf %33, %35 : vector<8x128xf32>
    %c0_13 = arith.constant 0 : index
    %c0_14 = arith.constant 0 : index
    %37 = vector.load %arg5[%c0_13, %c0_14] : memref<8x128xf32, #tpu.memory_space<vmem>>, vector<8x128xf32>
    tpu.vector_store %arg5[%c0_13, %c0_14], %36 {strides = array<i32>} : memref<8x128xf32, #tpu.memory_space<vmem>>, vector<8x128xf32>,
    return
  }
  func.func @transform_0(%arg0: i32, %arg1: i32) -> (i32, i32) {
    %c0_i32 = arith.constant 0 : i32
    return %arg0, %arg1 : i32, i32
  }
  func.func @transform_1(%arg0: i32, %arg1: i32) -> (i32, i32) {
    %c0_i32 = arith.constant 0 : i32
    %c0_i32_0 = arith.constant 0 : i32
    %c0_i32_1 = arith.constant 0 : i32
    return %c0_i32, %c0_i32_0 : i32, i32
  }
  func.func @transform_2(%arg0: i32, %arg1: i32) -> (i32, i32) {
    %c0_i32 = arith.constant 0 : i32
    %c0_i32_0 = arith.constant 0 : i32
    %c0_i32_1 = arith.constant 0 : i32
    return %c0_i32, %c0_i32_0 : i32, i32
  }
  func.func @transform_3(%arg0: i32, %arg1: i32) -> (i32, i32) {
    %c0_i32 = arith.constant 0 : i32
    %c0_i32_0 = arith.constant 0 : i32
    return %arg0, %c0_i32 : i32, i32
  }
}

</mosaic_0001>

<llo_original>
// kernel: tpu_custom_call.1
$region0: #{tpu_custom_call.1}
  #allocation0 [shape = 'u32[]', space=smem, size = 0x4, offset = 0x4, fixed_abs, tag = 'smem constant byte address 0x4 - core index']
  #allocation1 [shape = 'u32[144,128]{1,0:T(1,128)}', space=vmem, size = 0x12000, scoped, tag = 'internal scratch']
  %s0 = inlined_call_operand.hbm [shape: f32[20,256], index: 0, kind: input, shape index: {}]
  %s1 = inlined_call_operand.hbm [shape: f32[256,128], index: 1, kind: input, shape index: {}]
  %s2 = inlined_call_operand.vmem [shape: f32[3,128], index: 2, kind: input, shape index: {}]
  %s3 = inlined_call_operand.hbm [shape: f32[20,128], index: 3, kind: output, shape index: {}]
  %s4 = sld [smem:[#allocation0]]
  $region53: #{tpu_custom_call.1} parent=0
    _
  %s6 = ssub.s32 1, %s4
  %s7 = scalar_select 0, %s6, %s4
  $region1: #{tpu_custom_call.1} parent=0
    #allocation2 [shape = 'u8[16384]{0}', space=vmem, size = 0x4000, scoped, tag = 'input window, operand 0']
    #allocation3 [shape = 's32[2]{0}', space=sflag, size = 0x8, scoped, tag = 'scoped memory for tpu_custom_call.1']
    #allocation4 [shape = 's32[2]{0}', space=sflag, size = 0x8, scoped, tag = 'scoped memory for tpu_custom_call.1']
    #allocation5 [shape = 'u8[131072]{0}', space=vmem, size = 0x20000, scoped, tag = 'input window, operand 1, single buffered']
    #allocation6 [shape = 's32[1]{0}', space=sflag, size = 0x4, scoped, tag = 'scoped memory for tpu_custom_call.1']
    #allocation7 [shape = 'u8[8192]{0}', space=vmem, size = 0x2000, scoped, tag = 'output window, operand 0']
    %8 = vsyncpa [#allocation3], 0
    %s9 = scalar_lea.sflag [#allocation3], 1
    %10 = vsyncpa %s9, 0
    %11 = vsyncpa [#allocation6], 0
    %12 = vsyncpa [#allocation4], 0
    %s13 = scalar_lea.sflag [#allocation4], 1
    %14 = vsyncpa %s13, 0
    loop: start=0, step=1, limit=5
    $region2: #{tpu_custom_call.1} parent=1 // loop_pre_header
      _
    $region3: #{tpu_custom_call.1} parent=1 // loop_header
      %s16 = sphi 0, %s20
      %p17 = scmp.ge.s32.totalorder %s16, 5
      %s23 = sphi 0, %s35
      %s24 = sphi 0, %s31
      %s25 = sphi 0, %s23
      %s26 = sphi 0, %s24
      %s27 = sphi 0, %s25
      %s28 = sphi 0, %s26
      %s40 = sphi 0, %s42
      %s43 = sphi 0, %s40
      %s44 = sphi 0, %s43
      %s60 = sphi 0, %s44
      %s64 = sphi 0, %s64
      %s66 = sphi 0, %s64
      %s67 = sphi 0, %s66
      %s81 = sphi 0, %s67
      %s85 = sphi 0, %s85
      %s87 = sphi 0, %s85
      %s88 = sphi 0, %s87
      %s102 = sphi 0, %s88
      %s108 = sphi 0, %s110
      %s111 = sphi 0, %s108
      %s112 = sphi 0, %s111
      %s128 = sphi 0, %s112
    $region4: #{tpu_custom_call.1} parent=1 // loop_header_branch
      %19 = sbr.rel (%p17) target = $region8
    $region5: #{tpu_custom_call.1} parent=1 // loop_body
      %s21 = ssub.s32 %s16, 1
      %s22 = ssub.s32 %s16, 2
      %s29 = sadd.s32 1, %s24
      %p30 = scmp.ge.s32.totalorder %s29, 1
      %s31 = scalar_select %p30, 0, %s29
      %s32 = sadd.s32 1, %s23
      %s33 = scalar_select %p30, %s32, %s23
      %p34 = scmp.ge.s32.totalorder %s33, 3
      %s35 = scalar_select %p34, 0, %s33
      %s36 = ssub.s32 %s23, %s35
      %s37 = ssub.s32 %s24, %s31
      %s38 = sor.u32 %s36, %s37
      %p39 = scmp.eq.s32.totalorder %s38, 0
      %s41 = sadd.s32 %s40, 1
      %s42 = scalar_select %p39, %s40, %s41
      %p45 = pneg %p39
      %p46 = scmp.eq.s32.totalorder %s16, 2
      %p47 = por %p45, %p46
      %p48 = scmp.ne.s32.totalorder %s40, %s43
      %p49 = scmp.eq.s32.totalorder %s16, 0
      %p50 = por %p48, %p49
      %p51 = scmp.ne.s32.totalorder %s40, %s43
      %p52 = scmp.eq.s32.totalorder %s21, 2
      %p53 = por %p51, %p52
      %p54 = scmp.ne.s32.totalorder %s43, %s44
      %p55 = scmp.eq.s32.totalorder %s21, 0
      %p56 = por %p54, %p55
      %p57 = scmp.ne.s32.totalorder %s43, %s44
      %p58 = scmp.eq.s32.totalorder %s22, 2
      %p59 = por %p57, %p58
      %p61 = scmp.ne.s32.totalorder %s44, %s60
      %p62 = scmp.eq.s32.totalorder %s22, 0
      %p63 = por %p61, %p62
      %s65 = sadd.s32 %s64, 1
      %p68 = scmp.eq.s32.totalorder %s16, 2
      %p69 = scmp.ne.s32.totalorder %s64, %s66
      %p70 = scmp.eq.s32.totalorder %s16, 0
      %p71 = por %p69, %p70
      %p72 = scmp.ne.s32.totalorder %s64, %s66
      %p73 = scmp.eq.s32.totalorder %s21, 2
      %p74 = por %p72, %p73
      %p75 = scmp.ne.s32.totalorder %s66, %s67
      %p76 = scmp.eq.s32.totalorder %s21, 0
      %p77 = por %p75, %p76
      %p78 = scmp.ne.s32.totalorder %s66, %s67
      %p79 = scmp.eq.s32.totalorder %s22, 2
      %p80 = por %p78, %p79
      %p82 = scmp.ne.s32.totalorder %s67, %s81
      %p83 = scmp.eq.s32.totalorder %s22, 0
      %p84 = por %p82, %p83
      %s86 = sadd.s32 %s85, 1
      %p89 = scmp.eq.s32.totalorder %s16, 2
      %p90 = scmp.ne.s32.totalorder %s85, %s87
      %p91 = scmp.eq.s32.totalorder %s16, 0
      %p92 = por %p90, %p91
      %p93 = scmp.ne.s32.totalorder %s85, %s87
      %p94 = scmp.eq.s32.totalorder %s21, 2
      %p95 = por %p93, %p94
      %p96 = scmp.ne.s32.totalorder %s87, %s88
      %p97 = scmp.eq.s32.totalorder %s21, 0
      %p98 = por %p96, %p97
      %p99 = scmp.ne.s32.totalorder %s87, %s88
      %p100 = scmp.eq.s32.totalorder %s22, 2
      %p101 = por %p99, %p100
      %p103 = scmp.ne.s32.totalorder %s88, %s102
      %p104 = scmp.eq.s32.totalorder %s22, 0
      %p105 = por %p103, %p104
      %s106 = ssub.s32 %s23, %s35
      %p107 = scmp.eq.s32.totalorder %s106, 0
      %s109 = sadd.s32 %s108, 1
      %s110 = scalar_select %p107, %s108, %s109
      %p113 = pneg %p107
      %p114 = scmp.eq.s32.totalorder %s16, 2
      %p115 = por %p113, %p114
      %p116 = scmp.ne.s32.totalorder %s108, %s111
      %p117 = scmp.eq.s32.totalorder %s16, 0
      %p118 = por %p116, %p117
      %p119 = scmp.ne.s32.totalorder %s108, %s111
      %p120 = scmp.eq.s32.totalorder %s21, 2
      %p121 = por %p119, %p120
      %p122 = scmp.ne.s32.totalorder %s111, %s112
      %p123 = scmp.eq.s32.totalorder %s21, 0
      %p124 = por %p122, %p123
      %p125 = scmp.ne.s32.totalorder %s111, %s112
      %p126 = scmp.eq.s32.totalorder %s22, 2
      %p127 = por %p125, %p126
      %p129 = scmp.ne.s32.totalorder %s112, %s128
      %p130 = scmp.eq.s32.totalorder %s22, 0
      %p131 = por %p129, %p130
      %p132 = scmp.le.s32.totalorder 1, %s16
      %p133 = scmp.lt.s32.totalorder %s16, 4
      %p134 = pnand %p132, %p133
      %p135 = pneg %p134
      // Predicated region
      $region9: #{tpu_custom_call.1} parent=5 // pred_check
        _
      $region10: #{tpu_custom_call.1} parent=5 // pred_check_branch
        %137 = sbr.rel (%p134) target = $region12
      $region11: #{tpu_custom_call.1} parent=5 // pred_region
        %s138 = ssub.s32 %s16, 1
        // Predicated region
        $region13: #{tpu_custom_call.1} parent=11 // pred_check
          %p139 = pneg %p77
        $region14: #{tpu_custom_call.1} parent=11 // pred_check_branch
          %141 = sbr.rel (%p139) target = $region16
        $region15: #{tpu_custom_call.1} parent=11 // pred_region
          %s143 = ssub.s32 4096, 4096
          %144 = vsyncadd [#allocation6], %s143
          %s145 = sshll.u32 [#allocation5], 4
          %s146 = int_to_ptr.vmem [resolvable:$true] %s145
          %151 = dma.hbm_to_vmem [thread:$0]  %s1, 4096, %s146, [#allocation6], 128, 128, 8
        $region16: #{tpu_custom_call.1} parent=11 // pred_fallthru
          _
        // Predicated region
        $region17: #{tpu_custom_call.1} parent=11 // pred_check
          %p152 = pneg %p98
        $region18: #{tpu_custom_call.1} parent=11 // pred_check_branch
          %154 = sbr.rel (%p152) target = $region20
        $region19: #{tpu_custom_call.1} parent=11 // pred_region
          _
        $region20: #{tpu_custom_call.1} parent=11 // pred_fallthru
          _
      $region12: #{tpu_custom_call.1} parent=5 // pred_fallthru
        _
      %p155 = scmp.lt.s32.totalorder %s16, 3
      // Predicated region
      $region21: #{tpu_custom_call.1} parent=5 // pred_check
        %p156 = pneg %p155
      $region22: #{tpu_custom_call.1} parent=5 // pred_check_branch
        %158 = sbr.rel (%p156) target = $region24
      $region23: #{tpu_custom_call.1} parent=5 // pred_region
        // Predicated region
        $region25: #{tpu_custom_call.1} parent=23 // pred_check
          %p159 = pneg %p50
        $region26: #{tpu_custom_call.1} parent=23 // pred_check_branch
          %161 = sbr.rel (%p159) target = $region28
        $region27: #{tpu_custom_call.1} parent=23 // pred_region
          %s162 = sand.u32 %s40, 1
          %s163 = scalar_lea.sflag [#allocation3], %s162
          %s164 = sand.u32 %s40, 1
          %s165 = smul.addr %s164, 16
          %s166 = scalar_lea.vmem [#allocation2], %s165
          %s167 = smul.u32 2, %s24
          %s169 = ssub.s32 256, 256
          %170 = vsyncadd %s163, %s169
          %s171 = smul.addr %s23, 2
          %s172 = sadd.s32 %s167, %s171
          %s173 = smul.addr %s172, 128
          %s174 = scalar_lea.hbm %s0, %s173
          %s176 = sshll.u32 %s166, 4
          %s177 = int_to_ptr.vmem [resolvable:$true] %s176
          %179 = dma.hbm_to_vmem [thread:$0]  %s174, 256, %s177, %s163
        $region28: #{tpu_custom_call.1} parent=23 // pred_fallthru
          _
      $region24: #{tpu_custom_call.1} parent=5 // pred_fallthru
        _
      %p180 = scmp.le.s32.totalorder 1, %s16
      %p181 = scmp.lt.s32.totalorder %s16, 4
      %p182 = pnand %p180, %p181
      %p183 = pneg %p182
      // Predicated region
      $region29: #{tpu_custom_call.1} parent=5 // pred_check
        _
      $region30: #{tpu_custom_call.1} parent=5 // pred_check_branch
        %185 = sbr.rel (%p182) target = $region32
      $region31: #{tpu_custom_call.1} parent=5 // pred_region
        %s186 = ssub.s32 %s16, 1
        %s187 = sand.u32 %s43, 1
        %s188 = scalar_lea.sflag [#allocation3], %s187
        %s189 = sand.u32 %s43, 1
        %s190 = smul.addr %s189, 16
        %s191 = scalar_lea.vmem [#allocation2], %s190
        // Predicated region
        $region33: #{tpu_custom_call.1} parent=31 // pred_check
          %p192 = pneg %p56
        $region34: #{tpu_custom_call.1} parent=31 // pred_check_branch
          %194 = sbr.rel (%p192) target = $region36
        $region35: #{tpu_custom_call.1} parent=31 // pred_region
          %195 = dma.done %s188, 256
        $region36: #{tpu_custom_call.1} parent=31 // pred_fallthru
          _
        // Predicated region
        $region37: #{tpu_custom_call.1} parent=31 // pred_check
          %p196 = pneg %p77
        $region38: #{tpu_custom_call.1} parent=31 // pred_check_branch
          %198 = sbr.rel (%p196) target = $region40
        $region39: #{tpu_custom_call.1} parent=31 // pred_region
          %199 = dma.done [#allocation6], 4096
        $region40: #{tpu_custom_call.1} parent=31 // pred_fallthru
          _
        %s200 = sand.u32 %s43, 1
        %s201 = scalar_lea.sflag [#allocation3], %s200
        %s202 = sand.u32 %s43, 1
        %s203 = smul.addr %s202, 16
        %s204 = scalar_lea.vmem [#allocation2], %s203
        %p205 = pneg %p56
        %p206 = pneg %p53
        %p207 = pneg %p77
        %p208 = pneg %p74
        %p209 = pneg %p98
        %p210 = pneg %p95
        %p211 = pneg %p124
        %p212 = pneg %p121
        %s213 = sand.u32 %s111, 1
        %s214 = scalar_lea.sflag [#allocation4], %s213
        %s215 = sand.u32 %s111, 1
        %s216 = smul.addr %s215, 8
        %s217 = scalar_lea.vmem [#allocation7], %s216
        %s218 = smul.u32 2, %s26
        %v219 = vld [vmem:[%s191] sm:$0xff]
        %v220 = vld [vmem:[%s191 + $0x8] sm:$0xff]
        %v221 = vmul.f32 %v219, 0.5
        %v222 = vmul.f32 %v220, 0.5
        %v223 = vmul.f32 %v219, 0.70710677
        %v224 = vmul.f32 %v220, 0.70710677
        %v225 = verf.f32.pop %v223
        %v226 = verf.f32.pop %v224
        %v227 = vadd.f32 %v225, 1.0
        %v228 = vadd.f32 %v226, 1.0
        %v229 = vmul.f32 %v221, %v227
        %v230 = vmul.f32 %v222, %v228
        %v231 = vld [vmem:[#allocation5] sm:$0xff]
        %v232 = vld [vmem:[#allocation5 + $0x8] sm:$0xff]
        %v233 = vld [vmem:[#allocation5 + $0x10] sm:$0xff]
        %v234 = vld [vmem:[#allocation5 + $0x18] sm:$0xff]
        %v235 = vld [vmem:[#allocation5 + $0x20] sm:$0xff]
        %v236 = vld [vmem:[#allocation5 + $0x28] sm:$0xff]
        %v237 = vld [vmem:[#allocation5 + $0x30] sm:$0xff]
        %v238 = vld [vmem:[#allocation5 + $0x38] sm:$0xff]
        %v239 = vld [vmem:[#allocation5 + $0x40] sm:$0xff]
        %v240 = vld [vmem:[#allocation5 + $0x48] sm:$0xff]
        %v241 = vld [vmem:[#allocation5 + $0x50] sm:$0xff]
        %v242 = vld [vmem:[#allocation5 + $0x58] sm:$0xff]
        %v243 = vld [vmem:[#allocation5 + $0x60] sm:$0xff]
        %v244 = vld [vmem:[#allocation5 + $0x68] sm:$0xff]
        %v245 = vld [vmem:[#allocation5 + $0x70] sm:$0xff]
        %v246 = vld [vmem:[#allocation5 + $0x78] sm:$0xff]
        %v247 = vld [vmem:[#allocation5 + $0x80] sm:$0xff]
        %v248 = vld [vmem:[#allocation5 + $0x88] sm:$0xff]
        %v249 = vld [vmem:[#allocation5 + $0x90] sm:$0xff]
        %v250 = vld [vmem:[#allocation5 + $0x98] sm:$0xff]
        %v251 = vld [vmem:[#allocation5 + $0xa0] sm:$0xff]
        %v252 = vld [vmem:[#allocation5 + $0xa8] sm:$0xff]
        %v253 = vld [vmem:[#allocation5 + $0xb0] sm:$0xff]
        %v254 = vld [vmem:[#allocation5 + $0xb8] sm:$0xff]
        %v255 = vld [vmem:[#allocation5 + $0xc0] sm:$0xff]
        %v256 = vld [vmem:[#allocation5 + $0xc8] sm:$0xff]
        %v257 = vld [vmem:[#allocation5 + $0xd0] sm:$0xff]
        %v258 = vld [vmem:[#allocation5 + $0xd8] sm:$0xff]
        %v259 = vld [vmem:[#allocation5 + $0xe0] sm:$0xff]
        %v260 = vld [vmem:[#allocation5 + $0xe8] sm:$0xff]
        %v261 = vld [vmem:[#allocation5 + $0xf0] sm:$0xff]
        %v262 = vld [vmem:[#allocation5 + $0xf8] sm:$0xff]
        %v263 = vld [vmem:[%s2] sm:$0x7]
        %v264 = vlaneseq
        %v265 = vshrl.u32 %v264, 7
        %v266 = vsub.s32 0, %v265
        %v267 = vrot.slane %v263, %v266
        %268 = vmatprep.subr.mxu0 0.0
        %269 = vmatpush1.msra.mxu0 %v231
        %270 = vmatprep.subr.mxu0 0.0
        %271 = vmatpush1.msra.mxu0 %v232
        %272 = vmatprep.subr.mxu0 0.0
        %273 = vmatpush1.msra.mxu0 %v233
        %274 = vmatprep.subr.mxu0 0.0
        %275 = vmatpush1.msra.mxu0 %v234
        %276 = vmatprep.subr.mxu0 0.0
        %277 = vmatpush1.msra.mxu0 %v235
        %278 = vmatprep.subr.mxu0 0.0
        %279 = vmatpush1.msra.mxu0 %v236
        %280 = vmatprep.subr.mxu0 0.0
        %281 = vmatpush1.msra.mxu0 %v237
        %282 = vmatprep.subr.mxu0 0.0
        %283 = vmatpush1.msra.mxu0 %v238
        %284 = vmatprep.subr.mxu0 0.0
        %285 = vmatpush1.msra.mxu0 %v239
        %286 = vmatprep.subr.mxu0 0.0
        %287 = vmatpush1.msra.mxu0 %v240
        %288 = vmatprep.subr.mxu0 0.0
        %289 = vmatpush1.msra.mxu0 %v241
        %290 = vmatprep.subr.mxu0 0.0
        %291 = vmatpush1.msra.mxu0 %v242
        %292 = vmatprep.subr.mxu0 0.0
        %293 = vmatpush1.msra.mxu0 %v243
        %294 = vmatprep.subr.mxu0 0.0
        %295 = vmatpush1.msra.mxu0 %v244
        %296 = vmatprep.subr.mxu0 0.0
        %297 = vmatpush1.msra.mxu0 %v245
        %298 = vmatprep.subr.mxu0 0.0
        %299 = vmatpush1.msra.mxu0 %v246
        %300 = vmatprep.subr.mxu0 0.0
        %301 = vmatpush1.msra.mxu0 %v247
        %302 = vmatprep.subr.mxu0 0.0
        %303 = vmatpush1.msra.mxu0 %v248
        %304 = vmatprep.subr.mxu0 0.0
        %305 = vmatpush1.msra.mxu0 %v249
        %306 = vmatprep.subr.mxu0 0.0
        %307 = vmatpush1.msra.mxu0 %v250
        %308 = vmatprep.subr.mxu0 0.0
        %309 = vmatpush1.msra.mxu0 %v251
        %310 = vmatprep.subr.mxu0 0.0
        %311 = vmatpush1.msra.mxu0 %v252
        %312 = vmatprep.subr.mxu0 0.0
        %313 = vmatpush1.msra.mxu0 %v253
        %314 = vmatprep.subr.mxu0 0.0
        %315 = vmatpush1.msra.mxu0 %v254
        %316 = vmatprep.subr.mxu0 0.0
        %317 = vmatpush1.msra.mxu0 %v255
        %318 = vmatprep.subr.mxu0 0.0
        %319 = vmatpush1.msra.mxu0 %v256
        %320 = vmatprep.subr.mxu0 0.0
        %321 = vmatpush1.msra.mxu0 %v257
        %322 = vmatprep.subr.mxu0 0.0
        %323 = vmatpush1.msra.mxu0 %v258
        %324 = vmatprep.subr.mxu0 0.0
        %325 = vmatpush1.msra.mxu0 %v259
        %326 = vmatprep.subr.mxu0 0.0
        %327 = vmatpush1.msra.mxu0 %v260
        %328 = vmatprep.subr.mxu0 0.0
        %329 = vmatpush1.msra.mxu0 %v261
        %330 = vmatprep.subr.mxu0 0.0
        %331 = vmatpush1.msra.mxu0 %v262
        %332 = vmatprep.mubr.f32.mxu0 %v230
        %333 = vmatmul.mubr.f32.gmra.mrb[0].mxu0 %v229
        %v334 = vpop.f32.mrb[0].mxu0
        %v335 = vadd.f32 %v267, %v334
        %v336 = vpop.f32.mrb[0].mxu0
        %337 = vdwg.mxu0
        %338 = vadd.xlane.f32.xlu0 %v335
        %v339 = vpop.xlane.xlu0 %338
        %v340 = vrcp.pop 128.0
        %v341 = vmul.f32 %v339, %v340
        %v342 = vsub.f32 %v335, %v341
        %v343 = vmul.f32 %v342, %v342
        %344 = vadd.xlane.f32.xlu0 %v343
        %v345 = vpop.xlane.xlu0 %344
        %v346 = vmul.f32 %v345, %v340
        %v347 = vadd.f32 %v346, 1e-05
        %v348 = vrsqrt.pop %v347
        %v349 = vmul.f32 %v342, %v348
        %v350 = vlaneseq
        %v351 = vshrl.u32 %v350, 7
        %v352 = vsub.s32 1, %v351
        %v353 = vrot.slane %v263, %v352
        %v354 = vmul.f32 %v349, %v353
        %v355 = vlaneseq
        %v356 = vshrl.u32 %v355, 7
        %v357 = vsub.s32 2, %v356
        %v358 = vrot.slane %v263, %v357
        %v359 = vadd.f32 %v354, %v358
        %360 = vst [vmem:[%s217] sm:$0xff] %v359
        %s361 = sand.u32 %s111, 1
        %s362 = scalar_lea.sflag [#allocation4], %s361
        %s363 = sand.u32 %s111, 1
        %s364 = smul.addr %s363, 8
        %s365 = scalar_lea.vmem [#allocation7], %s364
        // Predicated region
        $region41: #{tpu_custom_call.1} parent=31 // pred_check
          %p366 = pneg %p121
        $region42: #{tpu_custom_call.1} parent=31 // pred_check_branch
          %368 = sbr.rel (%p366) target = $region44
        $region43: #{tpu_custom_call.1} parent=31 // pred_region
          %s370 = ssub.s32 128, 128
          %371 = vsyncadd %s362, %s370
          %s372 = smul.addr %s25, 128
          %s373 = scalar_lea.hbm %s3, %s372
          %s375 = sshll.u32 %s365, 4
          %s376 = int_to_ptr.vmem [resolvable:$true] %s375
          %378 = dma.vmem_to_hbm [thread:$0]  %s376, 128, %s373, %s362
        $region44: #{tpu_custom_call.1} parent=31 // pred_fallthru
          _
      $region32: #{tpu_custom_call.1} parent=5 // pred_fallthru
        _
      %p379 = scmp.le.s32.totalorder 2, %s16
      // Predicated region
      $region45: #{tpu_custom_call.1} parent=5 // pred_check
        %p380 = pneg %p379
      $region46: #{tpu_custom_call.1} parent=5 // pred_check_branch
        %382 = sbr.rel (%p380) target = $region48
      $region47: #{tpu_custom_call.1} parent=5 // pred_region
        %s383 = ssub.s32 %s16, 2
        // Predicated region
        $region49: #{tpu_custom_call.1} parent=47 // pred_check
          %p384 = pneg %p127
        $region50: #{tpu_custom_call.1} parent=47 // pred_check_branch
          %386 = sbr.rel (%p384) target = $region52
        $region51: #{tpu_custom_call.1} parent=47 // pred_region
          %s387 = sand.u32 %s112, 1
          %s388 = scalar_lea.sflag [#allocation4], %s387
          %s389 = sand.u32 %s112, 1
          %s390 = smul.addr %s389, 8
          %s391 = scalar_lea.vmem [#allocation7], %s390
          %392 = dma.done %s388, 128
        $region52: #{tpu_custom_call.1} parent=47 // pred_fallthru
          _
      $region48: #{tpu_custom_call.1} parent=5 // pred_fallthru
        _
    $region6: #{tpu_custom_call.1} parent=1 // loop_footer
      %s20 = sadd.s32 1, %s16
    $region7: #{tpu_custom_call.1} parent=1 // loop_footer_branch
      %15 = sbr.rel target = $region3
    $region8: #{tpu_custom_call.1} parent=1 // loop_exit
      _
    %393 = vsyncpa [#allocation3], 1
    %s394 = scalar_lea.sflag [#allocation3], 1
    %395 = vsyncpa %s394, 1
    %396 = vsyncpa [#allocation6], 1
    %397 = vsyncpa [#allocation4], 1
    %s398 = scalar_lea.sflag [#allocation4], 1
    %399 = vsyncpa %s398, 1

</llo_original>
